<compile_context>
chip_gen: v7x
topology: tpu7x:2x2x1
jax: 0.10.0
libtpu: 0.0.40
codegen_flags: <defaults>
</compile_context>

<pallas_src>
import functools

import jax
import jax.numpy as jnp
from jax.experimental import pallas as pl
from jax.experimental.pallas import tpu as pltpu


# ---------------------------------------------------------------------------
# Fused CA kernel
# ---------------------------------------------------------------------------
def _ca_kernel(x_ref, w1_ref, b1_ref, w2_ref, b2_ref, o_ref, *, n_batch):
    """x_ref/o_ref: (B, C, HW); w1: (Ch, C); b1: (Ch, 1); w2: (C, Ch); b2: (C, 1)."""
    w1 = w1_ref[...]
    b1 = b1_ref[...]
    w2 = w2_ref[...]
    b2 = b2_ref[...]

    # Static unroll over the (tiny) batch dimension; everything stays in VMEM.
    for b in range(n_batch):
        xv = x_ref[b]                                        # (C, HW), HW in lanes
        avg = jnp.mean(xv, axis=-1, keepdims=True)           # (C, 1) lane reduction
        mx = jnp.max(xv, axis=-1, keepdims=True)             # (C, 1)

        # fus(avg) and fus(max): 1x1 convs == weight @ column-vector (+ bias).
        ha = jnp.maximum(
            jnp.dot(w1, avg, preferred_element_type=jnp.float32) + b1, 0.0)  # (Ch,1)
        hm = jnp.maximum(
            jnp.dot(w1, mx, preferred_element_type=jnp.float32) + b1, 0.0)   # (Ch,1)

        # fus(avg) + fus(max): each fus application contributes one b2.
        logits = (jnp.dot(w2, ha, preferred_element_type=jnp.float32)
                  + jnp.dot(w2, hm, preferred_element_type=jnp.float32)
                  + 2.0 * b2)                                # (C, 1)

        mask = 1.0 / (1.0 + jnp.exp(-logits))                # sigmoid, f32 (EUP)
        o_ref[b] = (xv * mask).astype(o_ref.dtype)           # lane-dense store


def ca_forward(params, x):
    """x: (B, C, H, W) float32 (NCHW, same as PyTorch). Returns (B, C, H, W)."""
    B, C, H, W = x.shape
    Ch = params["w1"].shape[0]
    HW = H * W

    xr = x.reshape(B, C, HW)                                 # free row-major view

    out = pl.pallas_call(
        functools.partial(_ca_kernel, n_batch=B),
        out_shape=jax.ShapeDtypeStruct((B, C, HW), jnp.float32),
        grid=(1,),
        in_specs=[
            pl.BlockSpec((B, C, HW), lambda i: (0, 0, 0)),   # whole x in VMEM (~8 KiB)
            pl.BlockSpec((Ch, C), lambda i: (0, 0)),
            pl.BlockSpec((Ch, 1), lambda i: (0, 0)),
            pl.BlockSpec((C, Ch), lambda i: (0, 0)),
            pl.BlockSpec((C, 1), lambda i: (0, 0)),
        ],
        out_specs=pl.BlockSpec((B, C, HW), lambda i: (0, 0, 0)),
        compiler_params=pltpu.CompilerParams(
            dimension_semantics=("arbitrary",)),
    )(xr, params["w1"], params["b1"], params["w2"], params["b2"])

    return out.reshape(B, C, H, W)


# ---------------------------------------------------------------------------
# Pure-JAX reference (mirrors the PyTorch forward) for a sanity check
# ---------------------------------------------------------------------------
def ca_reference(params, x):
    avg = jnp.mean(x, axis=(2, 3))                           # (B, C)
    mx = jnp.max(x, axis=(2, 3))                             # (B, C)

    def fus(v):                                              # v: (B, C)
        h = jnp.maximum(v @ params["w1"].T + params["b1"][:, 0], 0.0)
        return h @ params["w2"].T + params["b2"][:, 0]

    mask = jax.nn.sigmoid(fus(avg) + fus(mx))                # (B, C)
    return x * mask[:, :, None, None]


# ---------------------------------------------------------------------------
# Deterministic parameter construction (matches nn.Conv2d weight layout)
# ---------------------------------------------------------------------------
def init_ca_params(key, in_ch):
    ch = in_ch // 2
    k1, k2, k3, k4 = jax.random.split(key, 4)
    return {
        # Conv2d(in_ch, in_ch//2, 1): weight (Cout, Cin, 1, 1) squeezed -> (Ch, C)
        "w1": (0.2 * jax.random.normal(k1, (ch, in_ch))).astype(jnp.float32),
        "b1": (0.05 * jax.random.normal(k2, (ch, 1))).astype(jnp.float32),
        # Conv2d(in_ch//2, in_ch, 1): weight squeezed -> (C, Ch)
        "w2": (0.2 * jax.random.normal(k3, (in_ch, ch))).astype(jnp.float32),
        "b2": (0.05 * jax.random.normal(k4, (in_ch, 1))).astype(jnp.float32),
    }


# ---------------------------------------------------------------------------
if __name__ == "__main__":
    key = jax.random.PRNGKey(0)
    kp, kx = jax.random.split(key)

    B, C, H, W = 2, 4, 16, 16                                # in_ch = 4
    params = init_ca_params(kp, C)
    x = jax.random.normal(kx, (B, C, H, W), jnp.float32)

    out = jax.jit(ca_forward)(params, x)
    out = jax.block_until_ready(out)

    ref = ca_reference(params, x)
    assert out.shape == (B, C, H, W) and out.dtype == jnp.float32
    assert jnp.allclose(out, ref, rtol=1e-3, atol=1e-3), "mismatch vs reference"

    print("KERNEL_OK")
</pallas_src>

<mosaic_0001>
module attributes {stable_mosaic.version = 11 : i64} {
  func.func @_ca_kernel(%arg0: i32, %arg1: memref<2x4x256xf32, #tpu.memory_space<vmem>>, %arg2: memref<2x4xf32, #tpu.memory_space<vmem>>, %arg3: memref<2x1xf32, #tpu.memory_space<vmem>>, %arg4: memref<4x2xf32, #tpu.memory_space<vmem>>, %arg5: memref<4x1xf32, #tpu.memory_space<vmem>>, %arg6: memref<2x4x256xf32, #tpu.memory_space<vmem>>) attributes {dimension_semantics = [#tpu.dimension_semantics<arbitrary>], iteration_bounds = array<i64: 1>, scalar_prefetch = 0 : i64, scratch_operands = 0 : i64, tpu.core_type = #tpu.core_type<tc>, window_params = [{pipeline_mode = #tpu.pipeline_mode<synchronous>, transform_indices = @transform_0, window_bounds = array<i64: 2, 4, 256>}, {pipeline_mode = #tpu.pipeline_mode<synchronous>, transform_indices = @transform_1, window_bounds = array<i64: 2, 4>}, {pipeline_mode = #tpu.pipeline_mode<synchronous>, transform_indices = @transform_2, window_bounds = array<i64: 2, 1>}, {pipeline_mode = #tpu.pipeline_mode<synchronous>, transform_indices = @transform_3, window_bounds = array<i64: 4, 2>}, {pipeline_mode = #tpu.pipeline_mode<synchronous>, transform_indices = @transform_4, window_bounds = array<i64: 4, 1>}, {pipeline_mode = #tpu.pipeline_mode<synchronous>, transform_indices = @transform_5, window_bounds = array<i64: 2, 4, 256>}]} {
    %c0 = arith.constant 0 : index
    %c0_0 = arith.constant 0 : index
    %0 = vector.load %arg2[%c0, %c0_0] : memref<2x4xf32, #tpu.memory_space<vmem>>, vector<2x4xf32>
    %c0_1 = arith.constant 0 : index
    %c0_2 = arith.constant 0 : index
    %1 = vector.load %arg3[%c0_1, %c0_2] : memref<2x1xf32, #tpu.memory_space<vmem>>, vector<2x1xf32>
    %c0_3 = arith.constant 0 : index
    %c0_4 = arith.constant 0 : index
    %2 = vector.load %arg4[%c0_3, %c0_4] : memref<4x2xf32, #tpu.memory_space<vmem>>, vector<4x2xf32>
    %c0_5 = arith.constant 0 : index
    %c0_6 = arith.constant 0 : index
    %3 = vector.load %arg5[%c0_5, %c0_6] : memref<4x1xf32, #tpu.memory_space<vmem>>, vector<4x1xf32>
    %c0_7 = arith.constant 0 : index
    %c0_8 = arith.constant 0 : index
    %c0_9 = arith.constant 0 : index
    %4 = vector.load %arg1[%c0_7, %c0_8, %c0_9] : memref<2x4x256xf32, #tpu.memory_space<vmem>>, vector<1x4x256xf32>
    %5 = vector.shape_cast %4 : vector<1x4x256xf32> to vector<4x256xf32>
    %cst = arith.constant dense<0.000000e+00> : vector<4xf32>
    %6 = vector.multi_reduction <add>, %5, %cst [1] : vector<4x256xf32> to vector<4xf32>
    %7 = vector.shape_cast %6 : vector<4xf32> to vector<4x1xf32>
    %cst_10 = arith.constant 2.560000e+02 : f32
    %8 = vector.broadcast %cst_10 : f32 to vector<4x1xf32>
    %9 = arith.divf %7, %8 : vector<4x1xf32>
    %cst_11 = arith.constant dense<0xFF800000> : vector<4xf32>
    %10 = vector.multi_reduction <maximumf>, %5, %cst_11 [1] : vector<4x256xf32> to vector<4xf32>
    %11 = vector.shape_cast %10 : vector<4xf32> to vector<4x1xf32>
    %cst_12 = arith.constant dense<0.000000e+00> : vector<2x1xf32>
    %12 = tpu.matmul %0, %9, %cst_12 {dimension_numbers = #tpu.dot_dimension_numbers<[1], [0], [0], [1], [0, 0, 1, 1], [], []>} : vector<2x4xf32>, vector<4x1xf32>, vector<2x1xf32> -> vector<2x1xf32>
    %13 = arith.addf %12, %1 : vector<2x1xf32>
    %cst_13 = arith.constant 0.000000e+00 : f32
    %14 = vector.broadcast %cst_13 : f32 to vector<2x1xf32>
    %15 = arith.maximumf %13, %14 : vector<2x1xf32>
    %cst_14 = arith.constant dense<0.000000e+00> : vector<2x1xf32>
    %16 = tpu.matmul %0, %11, %cst_14 {dimension_numbers = #tpu.dot_dimension_numbers<[1], [0], [0], [1], [0, 0, 1, 1], [], []>} : vector<2x4xf32>, vector<4x1xf32>, vector<2x1xf32> -> vector<2x1xf32>
    %17 = arith.addf %16, %1 : vector<2x1xf32>
    %cst_15 = arith.constant 0.000000e+00 : f32
    %18 = vector.broadcast %cst_15 : f32 to vector<2x1xf32>
    %19 = arith.maximumf %17, %18 : vector<2x1xf32>
    %cst_16 = arith.constant dense<0.000000e+00> : vector<4x1xf32>
    %20 = tpu.matmul %2, %15, %cst_16 {dimension_numbers = #tpu.dot_dimension_numbers<[1], [0], [0], [1], [0, 0, 1, 1], [], []>} : vector<4x2xf32>, vector<2x1xf32>, vector<4x1xf32> -> vector<4x1xf32>
    %cst_17 = arith.constant dense<0.000000e+00> : vector<4x1xf32>
    %21 = tpu.matmul %2, %19, %cst_17 {dimension_numbers = #tpu.dot_dimension_numbers<[1], [0], [0], [1], [0, 0, 1, 1], [], []>} : vector<4x2xf32>, vector<2x1xf32>, vector<4x1xf32> -> vector<4x1xf32>
    %22 = arith.addf %20, %21 : vector<4x1xf32>
    %cst_18 = arith.constant 2.000000e+00 : f32
    %23 = vector.broadcast %cst_18 : f32 to vector<4x1xf32>
    %24 = arith.mulf %23, %3 : vector<4x1xf32>
    %25 = arith.addf %22, %24 : vector<4x1xf32>
    %cst_19 = arith.constant 0.000000e+00 : f32
    %26 = vector.broadcast %cst_19 : f32 to vector<4x1xf32>
    %27 = arith.subf %26, %25 : vector<4x1xf32>
    %28 = math.exp %27 : vector<4x1xf32>
    %cst_20 = arith.constant 1.000000e+00 : f32
    %29 = vector.broadcast %cst_20 : f32 to vector<4x1xf32>
    %30 = arith.addf %29, %28 : vector<4x1xf32>
    %cst_21 = arith.constant 1.000000e+00 : f32
    %31 = vector.broadcast %cst_21 : f32 to vector<4x1xf32>
    %32 = arith.divf %31, %30 : vector<4x1xf32>
    %33 = vector.broadcast %32 : vector<4x1xf32> to vector<4x256xf32>
    %34 = arith.mulf %5, %33 : vector<4x256xf32>
    %c0_22 = arith.constant 0 : index
    %c0_23 = arith.constant 0 : index
    %c0_24 = arith.constant 0 : index
    %35 = vector.load %arg6[%c0_22, %c0_23, %c0_24] : memref<2x4x256xf32, #tpu.memory_space<vmem>>, vector<1x4x256xf32>
    %36 = vector.shape_cast %35 : vector<1x4x256xf32> to vector<4x256xf32>
    %37 = vector.shape_cast %34 : vector<4x256xf32> to vector<1x4x256xf32>
    tpu.vector_store %arg6[%c0_22, %c0_23, %c0_24], %37 {strides = array<i32>} : memref<2x4x256xf32, #tpu.memory_space<vmem>>, vector<1x4x256xf32>,
    %c1 = arith.constant 1 : index
    %c0_25 = arith.constant 0 : index
    %c0_26 = arith.constant 0 : index
    %38 = vector.load %arg1[%c1, %c0_25, %c0_26] : memref<2x4x256xf32, #tpu.memory_space<vmem>>, vector<1x4x256xf32>
    %39 = vector.shape_cast %38 : vector<1x4x256xf32> to vector<4x256xf32>
    %cst_27 = arith.constant dense<0.000000e+00> : vector<4xf32>
    %40 = vector.multi_reduction <add>, %39, %cst_27 [1] : vector<4x256xf32> to vector<4xf32>
    %41 = vector.shape_cast %40 : vector<4xf32> to vector<4x1xf32>
    %cst_28 = arith.constant 2.560000e+02 : f32
    %42 = vector.broadcast %cst_28 : f32 to vector<4x1xf32>
    %43 = arith.divf %41, %42 : vector<4x1xf32>
    %cst_29 = arith.constant dense<0xFF800000> : vector<4xf32>
    %44 = vector.multi_reduction <maximumf>, %39, %cst_29 [1] : vector<4x256xf32> to vector<4xf32>
    %45 = vector.shape_cast %44 : vector<4xf32> to vector<4x1xf32>
    %cst_30 = arith.constant dense<0.000000e+00> : vector<2x1xf32>
    %46 = tpu.matmul %0, %43, %cst_30 {dimension_numbers = #tpu.dot_dimension_numbers<[1], [0], [0], [1], [0, 0, 1, 1], [], []>} : vector<2x4xf32>, vector<4x1xf32>, vector<2x1xf32> -> vector<2x1xf32>
    %47 = arith.addf %46, %1 : vector<2x1xf32>
    %cst_31 = arith.constant 0.000000e+00 : f32
    %48 = vector.broadcast %cst_31 : f32 to vector<2x1xf32>
    %49 = arith.maximumf %47, %48 : vector<2x1xf32>
    %cst_32 = arith.constant dense<0.000000e+00> : vector<2x1xf32>
    %50 = tpu.matmul %0, %45, %cst_32 {dimension_numbers = #tpu.dot_dimension_numbers<[1], [0], [0], [1], [0, 0, 1, 1], [], []>} : vector<2x4xf32>, vector<4x1xf32>, vector<2x1xf32> -> vector<2x1xf32>
    %51 = arith.addf %50, %1 : vector<2x1xf32>
    %cst_33 = arith.constant 0.000000e+00 : f32
    %52 = vector.broadcast %cst_33 : f32 to vector<2x1xf32>
    %53 = arith.maximumf %51, %52 : vector<2x1xf32>
    %cst_34 = arith.constant dense<0.000000e+00> : vector<4x1xf32>
    %54 = tpu.matmul %2, %49, %cst_34 {dimension_numbers = #tpu.dot_dimension_numbers<[1], [0], [0], [1], [0, 0, 1, 1], [], []>} : vector<4x2xf32>, vector<2x1xf32>, vector<4x1xf32> -> vector<4x1xf32>
    %cst_35 = arith.constant dense<0.000000e+00> : vector<4x1xf32>
    %55 = tpu.matmul %2, %53, %cst_35 {dimension_numbers = #tpu.dot_dimension_numbers<[1], [0], [0], [1], [0, 0, 1, 1], [], []>} : vector<4x2xf32>, vector<2x1xf32>, vector<4x1xf32> -> vector<4x1xf32>
    %56 = arith.addf %54, %55 : vector<4x1xf32>
    %cst_36 = arith.constant 2.000000e+00 : f32
    %57 = vector.broadcast %cst_36 : f32 to vector<4x1xf32>
    %58 = arith.mulf %57, %3 : vector<4x1xf32>
    %59 = arith.addf %56, %58 : vector<4x1xf32>
    %cst_37 = arith.constant 0.000000e+00 : f32
    %60 = vector.broadcast %cst_37 : f32 to vector<4x1xf32>
    %61 = arith.subf %60, %59 : vector<4x1xf32>
    %62 = math.exp %61 : vector<4x1xf32>
    %cst_38 = arith.constant 1.000000e+00 : f32
    %63 = vector.broadcast %cst_38 : f32 to vector<4x1xf32>
    %64 = arith.addf %63, %62 : vector<4x1xf32>
    %cst_39 = arith.constant 1.000000e+00 : f32
    %65 = vector.broadcast %cst_39 : f32 to vector<4x1xf32>
    %66 = arith.divf %65, %64 : vector<4x1xf32>
    %67 = vector.broadcast %66 : vector<4x1xf32> to vector<4x256xf32>
    %68 = arith.mulf %39, %67 : vector<4x256xf32>
    %c1_40 = arith.constant 1 : index
    %c0_41 = arith.constant 0 : index
    %c0_42 = arith.constant 0 : index
    %69 = vector.load %arg6[%c1_40, %c0_41, %c0_42] : memref<2x4x256xf32, #tpu.memory_space<vmem>>, vector<1x4x256xf32>
    %70 = vector.shape_cast %69 : vector<1x4x256xf32> to vector<4x256xf32>
    %71 = vector.shape_cast %68 : vector<4x256xf32> to vector<1x4x256xf32>
    tpu.vector_store %arg6[%c1_40, %c0_41, %c0_42], %71 {strides = array<i32>} : memref<2x4x256xf32, #tpu.memory_space<vmem>>, vector<1x4x256xf32>,
    return
  }
  func.func @transform_0(%arg0: i32) -> (i32, i32, i32) {
    %c0_i32 = arith.constant 0 : i32
    %c0_i32_0 = arith.constant 0 : i32
    %c0_i32_1 = arith.constant 0 : i32
    %c0_i32_2 = arith.constant 0 : i32
    return %c0_i32, %c0_i32_0, %c0_i32_1 : i32, i32, i32
  }
  func.func @transform_1(%arg0: i32) -> (i32, i32) {
    %c0_i32 = arith.constant 0 : i32
    %c0_i32_0 = arith.constant 0 : i32
    %c0_i32_1 = arith.constant 0 : i32
    return %c0_i32, %c0_i32_0 : i32, i32
  }
  func.func @transform_2(%arg0: i32) -> (i32, i32) {
    %c0_i32 = arith.constant 0 : i32
    %c0_i32_0 = arith.constant 0 : i32
    %c0_i32_1 = arith.constant 0 : i32
    return %c0_i32, %c0_i32_0 : i32, i32
  }
  func.func @transform_3(%arg0: i32) -> (i32, i32) {
    %c0_i32 = arith.constant 0 : i32
    %c0_i32_0 = arith.constant 0 : i32
    %c0_i32_1 = arith.constant 0 : i32
    return %c0_i32, %c0_i32_0 : i32, i32
  }
  func.func @transform_4(%arg0: i32) -> (i32, i32) {
    %c0_i32 = arith.constant 0 : i32
    %c0_i32_0 = arith.constant 0 : i32
    %c0_i32_1 = arith.constant 0 : i32
    return %c0_i32, %c0_i32_0 : i32, i32
  }
  func.func @transform_5(%arg0: i32) -> (i32, i32, i32) {
    %c0_i32 = arith.constant 0 : i32
    %c0_i32_0 = arith.constant 0 : i32
    %c0_i32_1 = arith.constant 0 : i32
    %c0_i32_2 = arith.constant 0 : i32
    return %c0_i32, %c0_i32_0, %c0_i32_1 : i32, i32, i32
  }
}

</mosaic_0001>

<llo_original>
// kernel: ca_forward.1
$region0: #{ca_forward.1}
  #allocation0 [shape = 'u32[]', space=smem, size = 0x4, offset = 0x4, fixed_abs, tag = 'smem constant byte address 0x4 - core index']
  #allocation1 [shape = 'u32[144,128]{1,0:T(1,128)}', space=vmem, size = 0x12000, scoped, tag = 'internal scratch']
  %s0 = inlined_call_operand.vmem [shape: f32[2,4,256], index: 0, kind: input, shape index: {}]
  %s1 = inlined_call_operand.vmem [shape: f32[2,4], index: 1, kind: input, shape index: {}]
  %s2 = inlined_call_operand.vmem [shape: f32[2,1], index: 2, kind: input, shape index: {}]
  %s3 = inlined_call_operand.vmem [shape: f32[4,2], index: 3, kind: input, shape index: {}]
  %s4 = inlined_call_operand.vmem [shape: f32[4,1], index: 4, kind: input, shape index: {}]
  %s5 = inlined_call_operand.vmem [shape: f32[2,4,256], index: 5, kind: output, shape index: {}]
  %s6 = sld [smem:[#allocation0]]
  $region30: #{ca_forward.1} parent=0
    _
  %s8 = ssub.s32 1, %s6
  %s9 = scalar_select 0, %s8, %s6
  // Predicated region
  $region2: #{ca_forward.1} parent=0 // pred_check
    _
  $region3: #{ca_forward.1} parent=0 // pred_check_branch
    %11 = sbr.rel (0) target = $region5
  $region4: #{ca_forward.1} parent=0 // pred_region
    _
  $region5: #{ca_forward.1} parent=0 // pred_fallthru
    _
  // Predicated region
  $region6: #{ca_forward.1} parent=0 // pred_check
    _
  $region7: #{ca_forward.1} parent=0 // pred_check_branch
    %13 = sbr.rel (0) target = $region9
  $region8: #{ca_forward.1} parent=0 // pred_region
    _
  $region9: #{ca_forward.1} parent=0 // pred_fallthru
    _
  // Predicated region
  $region10: #{ca_forward.1} parent=0 // pred_check
    _
  $region11: #{ca_forward.1} parent=0 // pred_check_branch
    %15 = sbr.rel (0) target = $region13
  $region12: #{ca_forward.1} parent=0 // pred_region
    _
  $region13: #{ca_forward.1} parent=0 // pred_fallthru
    _
  // Predicated region
  $region14: #{ca_forward.1} parent=0 // pred_check
    _
  $region15: #{ca_forward.1} parent=0 // pred_check_branch
    %17 = sbr.rel (0) target = $region17
  $region16: #{ca_forward.1} parent=0 // pred_region
    _
  $region17: #{ca_forward.1} parent=0 // pred_fallthru
    _
  // Predicated region
  $region18: #{ca_forward.1} parent=0 // pred_check
    _
  $region19: #{ca_forward.1} parent=0 // pred_check_branch
    %19 = sbr.rel (0) target = $region21
  $region20: #{ca_forward.1} parent=0 // pred_region
    _
  $region21: #{ca_forward.1} parent=0 // pred_fallthru
    _
  %v20 = vld [vmem:[%s1] sm:$0x3]
  %v21 = vld [vmem:[%s2] sm:$0x3]
  %v22 = vld [vmem:[%s3] sm:$0xf]
  %v23 = vld [vmem:[%s4] sm:$0xf]
  %v24 = vld [vmem:[%s0] sm:$0xff]
  %v26 = vcombine.high %v24, %v24
  %vm28 = vcmask 1043456
  %v29 = vsel %vm28, %v24, 0.0
  %v30 = vsel %vm28, %v26, 0.0
  %v31 = vadd.f32 %v29, %v30
  %32 = vadd.xlane.f32.xlu0 %v31
  %v33 = vpop.xlane.xlu0 %32
  %v34 = vrcp.pop 256.0
  %v35 = vmul.f32 %v33, %v34
  %v36 = vsel %vm28, %v24, -inf
  %v37 = vsel %vm28, %v26, -inf
  %v38 = vmax.f32 %v36, %v37
  %39 = vmax.xlane.f32.xlu0 %v38
  %v40 = vpop.xlane.xlu0 %39
  %vm41 = vcmask 31744
  %v43 = vsel %vm41, %v20, 0
  %v46 = vsel %vm28, %v35, 0
  %48 = vmatprep.subr.mxu0 0.0
  %49 = vmatpush1.msra.mxu0 %v46
  %50 = vmatprep.subr.mxu0 0.0
  %51 = vmatpush1.msra.mxu0 0.0
  %52 = vmatprep.subr.mxu0 0.0
  %53 = vmatpush1.msra.mxu0 0.0
  %54 = vmatprep.subr.mxu0 0.0
  %55 = vmatpush1.msra.mxu0 0.0
  %56 = vmatprep.subr.mxu0 0.0
  %57 = vmatpush1.msra.mxu0 0.0
  %58 = vmatprep.subr.mxu0 0.0
  %59 = vmatpush1.msra.mxu0 0.0
  %60 = vmatprep.subr.mxu0 0.0
  %61 = vmatpush1.msra.mxu0 0.0
  %62 = vmatprep.subr.mxu0 0.0
  %63 = vmatpush1.msra.mxu0 0.0
  %64 = vmatprep.subr.mxu0 0.0
  %65 = vmatpush1.msra.mxu0 0.0
  %66 = vmatprep.subr.mxu0 0.0
  %67 = vmatpush1.msra.mxu0 0.0
  %68 = vmatprep.subr.mxu0 0.0
  %69 = vmatpush1.msra.mxu0 0.0
  %70 = vmatprep.subr.mxu0 0.0
  %71 = vmatpush1.msra.mxu0 0.0
  %72 = vmatprep.subr.mxu0 0.0
  %73 = vmatpush1.msra.mxu0 0.0
  %74 = vmatprep.subr.mxu0 0.0
  %75 = vmatpush1.msra.mxu0 0.0
  %76 = vmatprep.subr.mxu0 0.0
  %77 = vmatpush1.msra.mxu0 0.0
  %78 = vmatprep.subr.mxu0 0.0
  %79 = vmatpush1.msra.mxu0 0.0
  %80 = vmatprep.subr.mxu0 0.0
  %81 = vmatpush1.msra.mxu0 0.0
  %82 = vmatprep.subr.mxu0 0.0
  %83 = vmatpush1.msra.mxu0 0.0
  %84 = vmatprep.subr.mxu0 0.0
  %85 = vmatpush1.msra.mxu0 0.0
  %86 = vmatprep.subr.mxu0 0.0
  %87 = vmatpush1.msra.mxu0 0.0
  %88 = vmatprep.subr.mxu0 0.0
  %89 = vmatpush1.msra.mxu0 0.0
  %90 = vmatprep.subr.mxu0 0.0
  %91 = vmatpush1.msra.mxu0 0.0
  %92 = vmatprep.subr.mxu0 0.0
  %93 = vmatpush1.msra.mxu0 0.0
  %94 = vmatprep.subr.mxu0 0.0
  %95 = vmatpush1.msra.mxu0 0.0
  %96 = vmatprep.subr.mxu0 0.0
  %97 = vmatpush1.msra.mxu0 0.0
  %98 = vmatprep.subr.mxu0 0.0
  %99 = vmatpush1.msra.mxu0 0.0
  %100 = vmatprep.subr.mxu0 0.0
  %101 = vmatpush1.msra.mxu0 0.0
  %102 = vmatprep.subr.mxu0 0.0
  %103 = vmatpush1.msra.mxu0 0.0
  %104 = vmatprep.subr.mxu0 0.0
  %105 = vmatpush1.msra.mxu0 0.0
  %106 = vmatprep.subr.mxu0 0.0
  %107 = vmatpush1.msra.mxu0 0.0
  %108 = vmatprep.subr.mxu0 0.0
  %109 = vmatpush1.msra.mxu0 0.0
  %110 = vmatprep.subr.mxu0 0.0
  %111 = vmatpush1.msra.mxu0 0.0
  %112 = vmatprep.mubr.f32.mxu0 0.0
  %113 = vmatmul.mubr.f32.gmra.mrb[0].mxu0 %v43
  %v114 = vpop.f32.mrb[0].mxu0
  %v115 = vadd.f32 %v21, %v114
  %v116 = vpop.f32.mrb[0].mxu0
  %117 = vdwg.mxu0
  %v118 = vmax.f32 %v115, 0.0
  %v120 = vsel %vm28, %v40, 0
  %122 = vmatprep.subr.mxu0 0.0
  %123 = vmatpush1.msra.mxu0 %v120
  %124 = vmatprep.subr.mxu0 0.0
  %125 = vmatpush1.msra.mxu0 0.0
  %126 = vmatprep.subr.mxu0 0.0
  %127 = vmatpush1.msra.mxu0 0.0
  %128 = vmatprep.subr.mxu0 0.0
  %129 = vmatpush1.msra.mxu0 0.0
  %130 = vmatprep.subr.mxu0 0.0
  %131 = vmatpush1.msra.mxu0 0.0
  %132 = vmatprep.subr.mxu0 0.0
  %133 = vmatpush1.msra.mxu0 0.0
  %134 = vmatprep.subr.mxu0 0.0
  %135 = vmatpush1.msra.mxu0 0.0
  %136 = vmatprep.subr.mxu0 0.0
  %137 = vmatpush1.msra.mxu0 0.0
  %138 = vmatprep.subr.mxu0 0.0
  %139 = vmatpush1.msra.mxu0 0.0
  %140 = vmatprep.subr.mxu0 0.0
  %141 = vmatpush1.msra.mxu0 0.0
  %142 = vmatprep.subr.mxu0 0.0
  %143 = vmatpush1.msra.mxu0 0.0
  %144 = vmatprep.subr.mxu0 0.0
  %145 = vmatpush1.msra.mxu0 0.0
  %146 = vmatprep.subr.mxu0 0.0
  %147 = vmatpush1.msra.mxu0 0.0
  %148 = vmatprep.subr.mxu0 0.0
  %149 = vmatpush1.msra.mxu0 0.0
  %150 = vmatprep.subr.mxu0 0.0
  %151 = vmatpush1.msra.mxu0 0.0
  %152 = vmatprep.subr.mxu0 0.0
  %153 = vmatpush1.msra.mxu0 0.0
  %154 = vmatprep.subr.mxu0 0.0
  %155 = vmatpush1.msra.mxu0 0.0
  %156 = vmatprep.subr.mxu0 0.0
  %157 = vmatpush1.msra.mxu0 0.0
  %158 = vmatprep.subr.mxu0 0.0
  %159 = vmatpush1.msra.mxu0 0.0
  %160 = vmatprep.subr.mxu0 0.0
  %161 = vmatpush1.msra.mxu0 0.0
  %162 = vmatprep.subr.mxu0 0.0
  %163 = vmatpush1.msra.mxu0 0.0
  %164 = vmatprep.subr.mxu0 0.0
  %165 = vmatpush1.msra.mxu0 0.0
  %166 = vmatprep.subr.mxu0 0.0
  %167 = vmatpush1.msra.mxu0 0.0
  %168 = vmatprep.subr.mxu0 0.0
  %169 = vmatpush1.msra.mxu0 0.0
  %170 = vmatprep.subr.mxu0 0.0
  %171 = vmatpush1.msra.mxu0 0.0
  %172 = vmatprep.subr.mxu0 0.0
  %173 = vmatpush1.msra.mxu0 0.0
  %174 = vmatprep.subr.mxu0 0.0
  %175 = vmatpush1.msra.mxu0 0.0
  %176 = vmatprep.subr.mxu0 0.0
  %177 = vmatpush1.msra.mxu0 0.0
  %178 = vmatprep.subr.mxu0 0.0
  %179 = vmatpush1.msra.mxu0 0.0
  %180 = vmatprep.subr.mxu0 0.0
  %181 = vmatpush1.msra.mxu0 0.0
  %182 = vmatprep.subr.mxu0 0.0
  %183 = vmatpush1.msra.mxu0 0.0
  %184 = vmatprep.subr.mxu0 0.0
  %185 = vmatpush1.msra.mxu0 0.0
  %186 = vmatprep.mubr.f32.mxu0 0.0
  %187 = vmatmul.mubr.f32.gmra.mrb[0].mxu0 %v43
  %v188 = vpop.f32.mrb[0].mxu0
  %v189 = vadd.f32 %v21, %v188
  %v190 = vpop.f32.mrb[0].mxu0
  %191 = vdwg.mxu0
  %v192 = vmax.f32 %v189, 0.0
  %vm193 = vcmask 15360
  %v195 = vsel %vm193, %v22, 0
  %vm197 = vcmask 1041408
  %v199 = vsel %vm197, %v192, 0
  %201 = vmatprep.subr.mxu0 0.0
  %202 = vmatpush1.msra.mxu0 %v199
  %203 = vmatprep.subr.mxu0 0.0
  %204 = vmatpush1.msra.mxu0 0.0
  %205 = vmatprep.subr.mxu0 0.0
  %206 = vmatpush1.msra.mxu0 0.0
  %207 = vmatprep.subr.mxu0 0.0
  %208 = vmatpush1.msra.mxu0 0.0
  %209 = vmatprep.subr.mxu0 0.0
  %210 = vmatpush1.msra.mxu0 0.0
  %211 = vmatprep.subr.mxu0 0.0
  %212 = vmatpush1.msra.mxu0 0.0
  %213 = vmatprep.subr.mxu0 0.0
  %214 = vmatpush1.msra.mxu0 0.0
  %215 = vmatprep.subr.mxu0 0.0
  %216 = vmatpush1.msra.mxu0 0.0
  %217 = vmatprep.subr.mxu0 0.0
  %218 = vmatpush1.msra.mxu0 0.0
  %219 = vmatprep.subr.mxu0 0.0
  %220 = vmatpush1.msra.mxu0 0.0
  %221 = vmatprep.subr.mxu0 0.0
  %222 = vmatpush1.msra.mxu0 0.0
  %223 = vmatprep.subr.mxu0 0.0
  %224 = vmatpush1.msra.mxu0 0.0
  %225 = vmatprep.subr.mxu0 0.0
  %226 = vmatpush1.msra.mxu0 0.0
  %227 = vmatprep.subr.mxu0 0.0
  %228 = vmatpush1.msra.mxu0 0.0
  %229 = vmatprep.subr.mxu0 0.0
  %230 = vmatpush1.msra.mxu0 0.0
  %231 = vmatprep.subr.mxu0 0.0
  %232 = vmatpush1.msra.mxu0 0.0
  %233 = vmatprep.subr.mxu0 0.0
  %234 = vmatpush1.msra.mxu0 0.0
  %235 = vmatprep.subr.mxu0 0.0
  %236 = vmatpush1.msra.mxu0 0.0
  %237 = vmatprep.subr.mxu0 0.0
  %238 = vmatpush1.msra.mxu0 0.0
  %239 = vmatprep.subr.mxu0 0.0
  %240 = vmatpush1.msra.mxu0 0.0
  %241 = vmatprep.subr.mxu0 0.0
  %242 = vmatpush1.msra.mxu0 0.0
  %243 = vmatprep.subr.mxu0 0.0
  %244 = vmatpush1.msra.mxu0 0.0
  %245 = vmatprep.subr.mxu0 0.0
  %246 = vmatpush1.msra.mxu0 0.0
  %247 = vmatprep.subr.mxu0 0.0
  %248 = vmatpush1.msra.mxu0 0.0
  %249 = vmatprep.subr.mxu0 0.0
  %250 = vmatpush1.msra.mxu0 0.0
  %251 = vmatprep.subr.mxu0 0.0
  %252 = vmatpush1.msra.mxu0 0.0
  %253 = vmatprep.subr.mxu0 0.0
  %254 = vmatpush1.msra.mxu0 0.0
  %255 = vmatprep.subr.mxu0 0.0
  %256 = vmatpush1.msra.mxu0 0.0
  %257 = vmatprep.subr.mxu0 0.0
  %258 = vmatpush1.msra.mxu0 0.0
  %259 = vmatprep.subr.mxu0 0.0
  %260 = vmatpush1.msra.mxu0 0.0
  %261 = vmatprep.subr.mxu0 0.0
  %262 = vmatpush1.msra.mxu0 0.0
  %263 = vmatprep.subr.mxu0 0.0
  %264 = vmatpush1.msra.mxu0 0.0
  %265 = vmatprep.mubr.f32.mxu0 0.0
  %266 = vmatmul.mubr.f32.gmra.mrb[0].mxu0 %v195
  %v267 = vpop.f32.mrb[0].mxu0
  %v268 = vadd.f32 0.0, %v267
  %v269 = vpop.f32.mrb[0].mxu0
  %270 = vdwg.mxu0
  %v272 = vsel %vm197, %v118, 0
  %274 = vmatprep.subr.mxu0 0.0
  %275 = vmatpush1.msra.mxu0 %v272
  %276 = vmatprep.subr.mxu0 0.0
  %277 = vmatpush1.msra.mxu0 0.0
  %278 = vmatprep.subr.mxu0 0.0
  %279 = vmatpush1.msra.mxu0 0.0
  %280 = vmatprep.subr.mxu0 0.0
  %281 = vmatpush1.msra.mxu0 0.0
  %282 = vmatprep.subr.mxu0 0.0
  %283 = vmatpush1.msra.mxu0 0.0
  %284 = vmatprep.subr.mxu0 0.0
  %285 = vmatpush1.msra.mxu0 0.0
  %286 = vmatprep.subr.mxu0 0.0
  %287 = vmatpush1.msra.mxu0 0.0
  %288 = vmatprep.subr.mxu0 0.0
  %289 = vmatpush1.msra.mxu0 0.0
  %290 = vmatprep.subr.mxu0 0.0
  %291 = vmatpush1.msra.mxu0 0.0
  %292 = vmatprep.subr.mxu0 0.0
  %293 = vmatpush1.msra.mxu0 0.0
  %294 = vmatprep.subr.mxu0 0.0
  %295 = vmatpush1.msra.mxu0 0.0
  %296 = vmatprep.subr.mxu0 0.0
  %297 = vmatpush1.msra.mxu0 0.0
  %298 = vmatprep.subr.mxu0 0.0
  %299 = vmatpush1.msra.mxu0 0.0
  %300 = vmatprep.subr.mxu0 0.0
  %301 = vmatpush1.msra.mxu0 0.0
  %302 = vmatprep.subr.mxu0 0.0
  %303 = vmatpush1.msra.mxu0 0.0
  %304 = vmatprep.subr.mxu0 0.0
  %305 = vmatpush1.msra.mxu0 0.0
  %306 = vmatprep.subr.mxu0 0.0
  %307 = vmatpush1.msra.mxu0 0.0
  %308 = vmatprep.subr.mxu0 0.0
  %309 = vmatpush1.msra.mxu0 0.0
  %310 = vmatprep.subr.mxu0 0.0
  %311 = vmatpush1.msra.mxu0 0.0
  %312 = vmatprep.subr.mxu0 0.0
  %313 = vmatpush1.msra.mxu0 0.0
  %314 = vmatprep.subr.mxu0 0.0
  %315 = vmatpush1.msra.mxu0 0.0
  %316 = vmatprep.subr.mxu0 0.0
  %317 = vmatpush1.msra.mxu0 0.0
  %318 = vmatprep.subr.mxu0 0.0
  %319 = vmatpush1.msra.mxu0 0.0
  %320 = vmatprep.subr.mxu0 0.0
  %321 = vmatpush1.msra.mxu0 0.0
  %322 = vmatprep.subr.mxu0 0.0
  %323 = vmatpush1.msra.mxu0 0.0
  %324 = vmatprep.subr.mxu0 0.0
  %325 = vmatpush1.msra.mxu0 0.0
  %326 = vmatprep.subr.mxu0 0.0
  %327 = vmatpush1.msra.mxu0 0.0
  %328 = vmatprep.subr.mxu0 0.0
  %329 = vmatpush1.msra.mxu0 0.0
  %330 = vmatprep.subr.mxu0 0.0
  %331 = vmatpush1.msra.mxu0 0.0
  %332 = vmatprep.subr.mxu0 0.0
  %333 = vmatpush1.msra.mxu0 0.0
  %334 = vmatprep.subr.mxu0 0.0
  %335 = vmatpush1.msra.mxu0 0.0
  %336 = vmatprep.subr.mxu0 0.0
  %337 = vmatpush1.msra.mxu0 0.0
  %338 = vmatprep.mubr.f32.mxu0 0.0
  %339 = vmatmul.mubr.f32.gmra.mrb[0].mxu0 %v195
  %v340 = vpop.f32.mrb[0].mxu0
  %v341 = vadd.f32 %v268, %v340
  %v342 = vpop.f32.mrb[0].mxu0
  %343 = vdwg.mxu0
  %v344 = vmul.f32 %v23, 2.0
  %v345 = vadd.f32 %v341, %v344
  %v346 = vsub.f32 0.0, %v345
  %v347 = vmul.f32 %v346, 1.442695
  %v348 = vpow.pop %v347
  %v349 = vadd.f32 %v348, 1.0
  %v350 = vrcp.pop %v349
  %v351 = vmul.f32 1.0, %v350
  %353 = vset.pattern.permute.xlu0 0
  %354 = vperm.xlu0 %353, %v351
  %v355 = vpop.permute.xlu0 %354
  %v357 = vunpack.c.l.s4 839922192
  %v358 = vunpack.c.0.s8 %v357
  %v359 = vlaneseq
  %v360 = vshrl.u32 %v359, 7
  %v361 = vsub.s32 %v358, %v360
  %v362 = vrot.slane %v355, %v361
  %v364 = vmul.f32 %v24, %v362
  %365 = vst [vmem:[%s5] sm:$0xff] %v364
  %s366 = scalar_lea.vmem %s0, 8
  %v367 = vld [vmem:[%s366] sm:$0xff]
  %v369 = vcombine.high %v367, %v367
  %v371 = vsel %vm28, %v367, 0.0
  %v372 = vsel %vm28, %v369, 0.0
  %v373 = vadd.f32 %v371, %v372
  %374 = vadd.xlane.f32.xlu0 %v373
  %v375 = vpop.xlane.xlu0 %374
  %v376 = vmul.f32 %v375, %v34
  %v377 = vsel %vm28, %v367, -inf
  %v378 = vsel %vm28, %v369, -inf
  %v379 = vmax.f32 %v377, %v378
  %380 = vmax.xlane.f32.xlu0 %v379
  %v381 = vpop.xlane.xlu0 %380
  %v383 = vsel %vm28, %v376, 0
  %385 = vmatprep.subr.mxu0 0.0
  %386 = vmatpush1.msra.mxu0 %v383
  %387 = vmatprep.subr.mxu0 0.0
  %388 = vmatpush1.msra.mxu0 0.0
  %389 = vmatprep.subr.mxu0 0.0
  %390 = vmatpush1.msra.mxu0 0.0
  %391 = vmatprep.subr.mxu0 0.0
  %392 = vmatpush1.msra.mxu0 0.0
  %393 = vmatprep.subr.mxu0 0.0
  %394 = vmatpush1.msra.mxu0 0.0
  %395 = vmatprep.subr.mxu0 0.0
  %396 = vmatpush1.msra.mxu0 0.0
  %397 = vmatprep.subr.mxu0 0.0
  %398 = vmatpush1.msra.mxu0 0.0
  %399 = vmatprep.subr.mxu0 0.0
  %400 = vmatpush1.msra.mxu0 0.0
  %401 = vmatprep.subr.mxu0 0.0
  %402 = vmatpush1.msra.mxu0 0.0
  %403 = vmatprep.subr.mxu0 0.0
  %404 = vmatpush1.msra.mxu0 0.0
  %405 = vmatprep.subr.mxu0 0.0
  %406 = vmatpush1.msra.mxu0 0.0
  %407 = vmatprep.subr.mxu0 0.0
  %408 = vmatpush1.msra.mxu0 0.0
  %409 = vmatprep.subr.mxu0 0.0
  %410 = vmatpush1.msra.mxu0 0.0
  %411 = vmatprep.subr.mxu0 0.0
  %412 = vmatpush1.msra.mxu0 0.0
  %413 = vmatprep.subr.mxu0 0.0
  %414 = vmatpush1.msra.mxu0 0.0
  %415 = vmatprep.subr.mxu0 0.0
  %416 = vmatpush1.msra.mxu0 0.0
  %417 = vmatprep.subr.mxu0 0.0
  %418 = vmatpush1.msra.mxu0 0.0
  %419 = vmatprep.subr.mxu0 0.0
  %420 = vmatpush1.msra.mxu0 0.0
  %421 = vmatprep.subr.mxu0 0.0
  %422 = vmatpush1.msra.mxu0 0.0
  %423 = vmatprep.subr.mxu0 0.0
  %424 = vmatpush1.msra.mxu0 0.0
  %425 = vmatprep.subr.mxu0 0.0
  %426 = vmatpush1.msra.mxu0 0.0
  %427 = vmatprep.subr.mxu0 0.0
  %428 = vmatpush1.msra.mxu0 0.0
  %429 = vmatprep.subr.mxu0 0.0
  %430 = vmatpush1.msra.mxu0 0.0
  %431 = vmatprep.subr.mxu0 0.0
  %432 = vmatpush1.msra.mxu0 0.0
  %433 = vmatprep.subr.mxu0 0.0
  %434 = vmatpush1.msra.mxu0 0.0
  %435 = vmatprep.subr.mxu0 0.0
  %436 = vmatpush1.msra.mxu0 0.0
  %437 = vmatprep.subr.mxu0 0.0
  %438 = vmatpush1.msra.mxu0 0.0
  %439 = vmatprep.subr.mxu0 0.0
  %440 = vmatpush1.msra.mxu0 0.0
  %441 = vmatprep.subr.mxu0 0.0
  %442 = vmatpush1.msra.mxu0 0.0
  %443 = vmatprep.subr.mxu0 0.0
  %444 = vmatpush1.msra.mxu0 0.0
  %445 = vmatprep.subr.mxu0 0.0
  %446 = vmatpush1.msra.mxu0 0.0
  %447 = vmatprep.subr.mxu0 0.0
  %448 = vmatpush1.msra.mxu0 0.0
  %449 = vmatprep.mubr.f32.mxu0 0.0
  %450 = vmatmul.mubr.f32.gmra.mrb[0].mxu0 %v43
  %v451 = vpop.f32.mrb[0].mxu0
  %v452 = vadd.f32 %v21, %v451
  %v453 = vpop.f32.mrb[0].mxu0
  %454 = vdwg.mxu0
  %v455 = vmax.f32 %v452, 0.0
  %v457 = vsel %vm28, %v381, 0
  %459 = vmatprep.subr.mxu0 0.0
  %460 = vmatpush1.msra.mxu0 %v457
  %461 = vmatprep.subr.mxu0 0.0
  %462 = vmatpush1.msra.mxu0 0.0
  %463 = vmatprep.subr.mxu0 0.0
  %464 = vmatpush1.msra.mxu0 0.0
  %465 = vmatprep.subr.mxu0 0.0
  %466 = vmatpush1.msra.mxu0 0.0
  %467 = vmatprep.subr.mxu0 0.0
  %468 = vmatpush1.msra.mxu0 0.0
  %469 = vmatprep.subr.mxu0 0.0
  %470 = vmatpush1.msra.mxu0 0.0
  %471 = vmatprep.subr.mxu0 0.0
  %472 = vmatpush1.msra.mxu0 0.0
  %473 = vmatprep.subr.mxu0 0.0
  %474 = vmatpush1.msra.mxu0 0.0
  %475 = vmatprep.subr.mxu0 0.0
  %476 = vmatpush1.msra.mxu0 0.0
  %477 = vmatprep.subr.mxu0 0.0
  %478 = vmatpush1.msra.mxu0 0.0
  %479 = vmatprep.subr.mxu0 0.0
  %480 = vmatpush1.msra.mxu0 0.0
  %481 = vmatprep.subr.mxu0 0.0
  %482 = vmatpush1.msra.mxu0 0.0
  %483 = vmatprep.subr.mxu0 0.0
  %484 = vmatpush1.msra.mxu0 0.0
  %485 = vmatprep.subr.mxu0 0.0
  %486 = vmatpush1.msra.mxu0 0.0
  %487 = vmatprep.subr.mxu0 0.0
  %488 = vmatpush1.msra.mxu0 0.0
  %489 = vmatprep.subr.mxu0 0.0
  %490 = vmatpush1.msra.mxu0 0.0
  %491 = vmatprep.subr.mxu0 0.0
  %492 = vmatpush1.msra.mxu0 0.0
  %493 = vmatprep.subr.mxu0 0.0
  %494 = vmatpush1.msra.mxu0 0.0
  %495 = vmatprep.subr.mxu0 0.0
  %496 = vmatpush1.msra.mxu0 0.0
  %497 = vmatprep.subr.mxu0 0.0
  %498 = vmatpush1.msra.mxu0 0.0
  %499 = vmatprep.subr.mxu0 0.0
  %500 = vmatpush1.msra.mxu0 0.0
  %501 = vmatprep.subr.mxu0 0.0
  %502 = vmatpush1.msra.mxu0 0.0
  %503 = vmatprep.subr.mxu0 0.0
  %504 = vmatpush1.msra.mxu0 0.0
  %505 = vmatprep.subr.mxu0 0.0
  %506 = vmatpush1.msra.mxu0 0.0
  %507 = vmatprep.subr.mxu0 0.0
  %508 = vmatpush1.msra.mxu0 0.0
  %509 = vmatprep.subr.mxu0 0.0
  %510 = vmatpush1.msra.mxu0 0.0
  %511 = vmatprep.subr.mxu0 0.0
  %512 = vmatpush1.msra.mxu0 0.0
  %513 = vmatprep.subr.mxu0 0.0
  %514 = vmatpush1.msra.mxu0 0.0
  %515 = vmatprep.subr.mxu0 0.0
  %516 = vmatpush1.msra.mxu0 0.0
  %517 = vmatprep.subr.mxu0 0.0
  %518 = vmatpush1.msra.mxu0 0.0
  %519 = vmatprep.subr.mxu0 0.0
  %520 = vmatpush1.msra.mxu0 0.0
  %521 = vmatprep.subr.mxu0 0.0
  %522 = vmatpush1.msra.mxu0 0.0
  %523 = vmatprep.mubr.f32.mxu0 0.0
  %524 = vmatmul.mubr.f32.gmra.mrb[0].mxu0 %v43
  %v525 = vpop.f32.mrb[0].mxu0
  %v526 = vadd.f32 %v21, %v525
  %v527 = vpop.f32.mrb[0].mxu0
  %528 = vdwg.mxu0
  %v529 = vmax.f32 %v526, 0.0
  %v531 = vsel %vm197, %v529, 0
  %533 = vmatprep.subr.mxu0 0.0
  %534 = vmatpush1.msra.mxu0 %v531
  %535 = vmatprep.subr.mxu0 0.0
  %536 = vmatpush1.msra.mxu0 0.0
  %537 = vmatprep.subr.mxu0 0.0
  %538 = vmatpush1.msra.mxu0 0.0
  %539 = vmatprep.subr.mxu0 0.0
  %540 = vmatpush1.msra.mxu0 0.0
  %541 = vmatprep.subr.mxu0 0.0
  %542 = vmatpush1.msra.mxu0 0.0
  %543 = vmatprep.subr.mxu0 0.0
  %544 = vmatpush1.msra.mxu0 0.0
  %545 = vmatprep.subr.mxu0 0.0
  %546 = vmatpush1.msra.mxu0 0.0
  %547 = vmatprep.subr.mxu0 0.0
  %548 = vmatpush1.msra.mxu0 0.0
  %549 = vmatprep.subr.mxu0 0.0
  %550 = vmatpush1.msra.mxu0 0.0
  %551 = vmatprep.subr.mxu0 0.0
  %552 = vmatpush1.msra.mxu0 0.0
  %553 = vmatprep.subr.mxu0 0.0
  %554 = vmatpush1.msra.mxu0 0.0
  %555 = vmatprep.subr.mxu0 0.0
  %556 = vmatpush1.msra.mxu0 0.0
  %557 = vmatprep.subr.mxu0 0.0
  %558 = vmatpush1.msra.mxu0 0.0
  %559 = vmatprep.subr.mxu0 0.0
  %560 = vmatpush1.msra.mxu0 0.0
  %561 = vmatprep.subr.mxu0 0.0
  %562 = vmatpush1.msra.mxu0 0.0
  %563 = vmatprep.subr.mxu0 0.0
  %564 = vmatpush1.msra.mxu0 0.0
  %565 = vmatprep.subr.mxu0 0.0
  %566 = vmatpush1.msra.mxu0 0.0
  %567 = vmatprep.subr.mxu0 0.0
  %568 = vmatpush1.msra.mxu0 0.0
  %569 = vmatprep.subr.mxu0 0.0
  %570 = vmatpush1.msra.mxu0 0.0
  %571 = vmatprep.subr.mxu0 0.0
  %572 = vmatpush1.msra.mxu0 0.0
  %573 = vmatprep.subr.mxu0 0.0
  %574 = vmatpush1.msra.mxu0 0.0
  %575 = vmatprep.subr.mxu0 0.0
  %576 = vmatpush1.msra.mxu0 0.0
  %577 = vmatprep.subr.mxu0 0.0
  %578 = vmatpush1.msra.mxu0 0.0
  %579 = vmatprep.subr.mxu0 0.0
  %580 = vmatpush1.msra.mxu0 0.0
  %581 = vmatprep.subr.mxu0 0.0
  %582 = vmatpush1.msra.mxu0 0.0
  %583 = vmatprep.subr.mxu0 0.0
  %584 = vmatpush1.msra.mxu0 0.0
  %585 = vmatprep.subr.mxu0 0.0
  %586 = vmatpush1.msra.mxu0 0.0
  %587 = vmatprep.subr.mxu0 0.0
  %588 = vmatpush1.msra.mxu0 0.0
  %589 = vmatprep.subr.mxu0 0.0
  %590 = vmatpush1.msra.mxu0 0.0
  %591 = vmatprep.subr.mxu0 0.0
  %592 = vmatpush1.msra.mxu0 0.0
  %593 = vmatprep.subr.mxu0 0.0
  %594 = vmatpush1.msra.mxu0 0.0
  %595 = vmatprep.subr.mxu0 0.0
  %596 = vmatpush1.msra.mxu0 0.0
  %597 = vmatprep.mubr.f32.mxu0 0.0
  %598 = vmatmul.mubr.f32.gmra.mrb[0].mxu0 %v195
  %v599 = vpop.f32.mrb[0].mxu0
  %v600 = vadd.f32 0.0, %v599
  %v601 = vpop.f32.mrb[0].mxu0
  %602 = vdwg.mxu0
  %v604 = vsel %vm197, %v455, 0
  %606 = vmatprep.subr.mxu0 0.0
  %607 = vmatpush1.msra.mxu0 %v604
  %608 = vmatprep.subr.mxu0 0.0
  %609 = vmatpush1.msra.mxu0 0.0
  %610 = vmatprep.subr.mxu0 0.0
  %611 = vmatpush1.msra.mxu0 0.0
  %612 = vmatprep.subr.mxu0 0.0
  %613 = vmatpush1.msra.mxu0 0.0
  %614 = vmatprep.subr.mxu0 0.0
  %615 = vmatpush1.msra.mxu0 0.0
  %616 = vmatprep.subr.mxu0 0.0
  %617 = vmatpush1.msra.mxu0 0.0
  %618 = vmatprep.subr.mxu0 0.0
  %619 = vmatpush1.msra.mxu0 0.0
  %620 = vmatprep.subr.mxu0 0.0
  %621 = vmatpush1.msra.mxu0 0.0
  %622 = vmatprep.subr.mxu0 0.0
  %623 = vmatpush1.msra.mxu0 0.0
  %624 = vmatprep.subr.mxu0 0.0
  %625 = vmatpush1.msra.mxu0 0.0
  %626 = vmatprep.subr.mxu0 0.0
  %627 = vmatpush1.msra.mxu0 0.0
  %628 = vmatprep.subr.mxu0 0.0
  %629 = vmatpush1.msra.mxu0 0.0
  %630 = vmatprep.subr.mxu0 0.0
  %631 = vmatpush1.msra.mxu0 0.0
  %632 = vmatprep.subr.mxu0 0.0
  %633 = vmatpush1.msra.mxu0 0.0
  %634 = vmatprep.subr.mxu0 0.0
  %635 = vmatpush1.msra.mxu0 0.0
  %636 = vmatprep.subr.mxu0 0.0
  %637 = vmatpush1.msra.mxu0 0.0
  %638 = vmatprep.subr.mxu0 0.0
  %639 = vmatpush1.msra.mxu0 0.0
  %640 = vmatprep.subr.mxu0 0.0
  %641 = vmatpush1.msra.mxu0 0.0
  %642 = vmatprep.subr.mxu0 0.0
  %643 = vmatpush1.msra.mxu0 0.0
  %644 = vmatprep.subr.mxu0 0.0
  %645 = vmatpush1.msra.mxu0 0.0
  %646 = vmatprep.subr.mxu0 0.0
  %647 = vmatpush1.msra.mxu0 0.0
  %648 = vmatprep.subr.mxu0 0.0
  %649 = vmatpush1.msra.mxu0 0.0
  %650 = vmatprep.subr.mxu0 0.0
  %651 = vmatpush1.msra.mxu0 0.0
  %652 = vmatprep.subr.mxu0 0.0
  %653 = vmatpush1.msra.mxu0 0.0
  %654 = vmatprep.subr.mxu0 0.0
  %655 = vmatpush1.msra.mxu0 0.0
  %656 = vmatprep.subr.mxu0 0.0
  %657 = vmatpush1.msra.mxu0 0.0
  %658 = vmatprep.subr.mxu0 0.0
  %659 = vmatpush1.msra.mxu0 0.0
  %660 = vmatprep.subr.mxu0 0.0
  %661 = vmatpush1.msra.mxu0 0.0
  %662 = vmatprep.subr.mxu0 0.0
  %663 = vmatpush1.msra.mxu0 0.0
  %664 = vmatprep.subr.mxu0 0.0
  %665 = vmatpush1.msra.mxu0 0.0
  %666 = vmatprep.subr.mxu0 0.0
  %667 = vmatpush1.msra.mxu0 0.0
  %668 = vmatprep.subr.mxu0 0.0
  %669 = vmatpush1.msra.mxu0 0.0
  %670 = vmatprep.mubr.f32.mxu0 0.0
  %671 = vmatmul.mubr.f32.gmra.mrb[0].mxu0 %v195
  %v672 = vpop.f32.mrb[0].mxu0
  %v673 = vadd.f32 %v600, %v672
  %v674 = vpop.f32.mrb[0].mxu0
  %675 = vdwg.mxu0
  %v676 = vadd.f32 %v673, %v344
  %v677 = vsub.f32 0.0, %v676
  %v678 = vmul.f32 %v677, 1.442695
  %v679 = vpow.pop %v678
  %v680 = vadd.f32 %v679, 1.0
  %v681 = vrcp.pop %v680
  %v682 = vmul.f32 1.0, %v681
  %684 = vset.pattern.permute.xlu0 0
  %685 = vperm.xlu0 %684, %v682
  %v686 = vpop.permute.xlu0 %685
  %v688 = vunpack.c.l.s4 839922192
  %v689 = vunpack.c.0.s8 %v688
  %v690 = vlaneseq
  %v691 = vshrl.u32 %v690, 7
  %v692 = vsub.s32 %v689, %v691
  %v693 = vrot.slane %v686, %v692
  %v695 = vmul.f32 %v367, %v693
  %s696 = scalar_lea.vmem %s5, 8
  %697 = vst [vmem:[%s696] sm:$0xff] %v695
  // Predicated region
  $region22: #{ca_forward.1} parent=0 // pred_check
    _
  $region23: #{ca_forward.1} parent=0 // pred_check_branch
    %699 = sbr.rel (0) target = $region25
  $region24: #{ca_forward.1} parent=0 // pred_region
    _
  $region25: #{ca_forward.1} parent=0 // pred_fallthru
    _
  // Predicated region
  $region26: #{ca_forward.1} parent=0 // pred_check
    _
  $region27: #{ca_forward.1} parent=0 // pred_check_branch
    %701 = sbr.rel (0) target = $region29
  $region28: #{ca_forward.1} parent=0 // pred_region
    _
  $region29: #{ca_forward.1} parent=0 // pred_fallthru
    _

</llo_original>
